<compile_context>
chip_gen: v6e
topology: v6e:2x2x1
jax: 0.10.0
libtpu: 0.0.40
codegen_flags: <defaults>
</compile_context>

<pallas_src>
import functools

import jax
import jax.numpy as jnp
from jax.experimental import pallas as pl
from jax.experimental.pallas import tpu as pltpu


def _round_up(n, m):
    return ((n + m - 1) // m) * m


def vae_kernel(x_ref, wenc_ref, benc_ref, w2_ref, b2_ref, eps_ref,
               recon_ref, mean_ref, logvar_ref, *, lat_p):
    # encode: one fused [TB, Dp] @ [Dp, 2*Lp] matmul (bf16 inputs, f32 accumulate)
    xb = x_ref[...].astype(jnp.bfloat16)
    enc = jnp.dot(xb, wenc_ref[...], preferred_element_type=jnp.float32)
    enc = enc + benc_ref[...]
    mean = enc[:, :lat_p]         # 128-aligned static slices
    logvar = enc[:, lat_p:]

    # reparameterize (f32 elementwise; exp runs on the EUP)
    z = mean + eps_ref[...] * jnp.exp(0.5 * logvar)

    # decode
    logits = jnp.dot(z.astype(jnp.bfloat16), w2_ref[...],
                     preferred_element_type=jnp.float32) + b2_ref[...]
    # sigmoid(x) = 1 / (1 + exp(-x)); exp + approx reciprocal both go to the EUP slot
    recon_ref[...] = pl.reciprocal(1.0 + jnp.exp(-logits), approx=True)

    mean_ref[...] = mean
    logvar_ref[...] = logvar


def very_simple_vae_forward(x, params, eps, *, tile_b=256):
    """x: [B, input_dim] f32. eps: [B, latent_dim] f32 (the randn_like draw).
    params: PyTorch-Linear-equivalent weights, stored pre-transposed [in, out]
    with biases [1, out]."""
    B, input_dim = x.shape
    latent_dim = params["wm"].shape[1]

    d_p = _round_up(input_dim, 128)     # lane-dense decoder/output width
    l_p = _round_up(latent_dim, 128)    # lane-dense latent width
    tb = min(tile_b, _round_up(B, 8))   # batch tile (sublane-aligned)
    b_p = _round_up(B, tb)

    f32, bf16 = jnp.float32, jnp.bfloat16

    # fused encoder weight/bias: [Dp, 2*Lp] = [Wm | Wl], zero-padded
    w_enc = jnp.zeros((d_p, 2 * l_p), bf16)
    w_enc = w_enc.at[:input_dim, :latent_dim].set(params["wm"].astype(bf16))
    w_enc = w_enc.at[:input_dim, l_p:l_p + latent_dim].set(params["wl"].astype(bf16))
    b_enc = jnp.zeros((1, 2 * l_p), f32)
    b_enc = b_enc.at[:, :latent_dim].set(params["bm"])
    b_enc = b_enc.at[:, l_p:l_p + latent_dim].set(params["bl"])

    w2 = jnp.zeros((l_p, d_p), bf16).at[:latent_dim, :input_dim].set(
        params["w2"].astype(bf16))
    b2 = jnp.zeros((1, d_p), f32).at[:, :input_dim].set(params["b2"])

    x_p = jnp.zeros((b_p, d_p), f32).at[:B, :input_dim].set(x)
    eps_p = jnp.zeros((b_p, l_p), f32).at[:B, :latent_dim].set(eps)

    # VMEM budget: resident weights + double-buffered streamed tiles + slack.
    weight_bytes = w_enc.size * 2 + b_enc.size * 4 + w2.size * 2 + b2.size * 4
    stream_bytes = tb * (d_p * 4 + l_p * 4 + d_p * 4 + 2 * l_p * 4)
    vmem_limit = int(min(max(2 * (weight_bytes + stream_bytes) + (8 << 20),
                             32 << 20), 48 << 20))  # headroom-safe on v7x's 64 MiB

    kernel = functools.partial(vae_kernel, lat_p=l_p)
    recon_p, mean_p, logvar_p = pl.pallas_call(
        kernel,
        out_shape=(
            jax.ShapeDtypeStruct((b_p, d_p), f32),   # recon (padded)
            jax.ShapeDtypeStruct((b_p, l_p), f32),   # mean  (padded)
            jax.ShapeDtypeStruct((b_p, l_p), f32),   # logvar (padded)
        ),
        grid=(b_p // tb,),
        in_specs=[
            pl.BlockSpec((tb, d_p), lambda i: (i, 0)),        # x tile (streamed)
            pl.BlockSpec((d_p, 2 * l_p), lambda i: (0, 0)),   # fused enc W (resident)
            pl.BlockSpec((1, 2 * l_p), lambda i: (0, 0)),     # fused enc bias
            pl.BlockSpec((l_p, d_p), lambda i: (0, 0)),       # dec W (resident)
            pl.BlockSpec((1, d_p), lambda i: (0, 0)),         # dec bias
            pl.BlockSpec((tb, l_p), lambda i: (i, 0)),        # eps tile (streamed)
        ],
        out_specs=(
            pl.BlockSpec((tb, d_p), lambda i: (i, 0)),
            pl.BlockSpec((tb, l_p), lambda i: (i, 0)),
            pl.BlockSpec((tb, l_p), lambda i: (i, 0)),
        ),
        compiler_params=pltpu.CompilerParams(
            dimension_semantics=("parallel",),   # batch-parallel: shards across TCs on v7x
            vmem_limit_bytes=vmem_limit,
        ),
    )(x_p, w_enc, b_enc, w2, b2, eps_p)

    # slice off the zero-padded lanes/rows
    return (recon_p[:B, :input_dim],
            mean_p[:B, :latent_dim],
            logvar_p[:B, :latent_dim])


def init_params(key, input_dim, latent_dim):
    """Deterministic synthetic init (PyTorch-Linear-like uniform bounds)."""
    ks = jax.random.split(key, 6)
    bound_enc = 1.0 / jnp.sqrt(input_dim)
    bound_dec = 1.0 / jnp.sqrt(latent_dim)
    return {
        # stored as [in, out] (transpose of torch's [out, in])
        "wm": jax.random.uniform(ks[0], (input_dim, latent_dim), jnp.float32,
                                 -bound_enc, bound_enc),
        "bm": jax.random.uniform(ks[1], (1, latent_dim), jnp.float32,
                                 -bound_enc, bound_enc),
        "wl": jax.random.uniform(ks[2], (input_dim, latent_dim), jnp.float32,
                                 -bound_enc, bound_enc),
        "bl": jax.random.uniform(ks[3], (1, latent_dim), jnp.float32,
                                 -bound_enc, bound_enc),
        "w2": jax.random.uniform(ks[4], (latent_dim, input_dim), jnp.float32,
                                 -bound_dec, bound_dec),
        "b2": jax.random.uniform(ks[5], (1, input_dim), jnp.float32,
                                 -bound_dec, bound_dec),
    }


def ref_forward(x, params, eps):
    """Plain-JAX reference with the same bf16-in / f32-accumulate matmul numerics."""
    bf16 = jnp.bfloat16
    xb = x.astype(bf16)
    mean = jnp.dot(xb, params["wm"].astype(bf16),
                   preferred_element_type=jnp.float32) + params["bm"]
    logvar = jnp.dot(xb, params["wl"].astype(bf16),
                     preferred_element_type=jnp.float32) + params["bl"]
    z = mean + eps * jnp.exp(0.5 * logvar)
    recon = jax.nn.sigmoid(jnp.dot(z.astype(bf16), params["w2"].astype(bf16),
                                   preferred_element_type=jnp.float32) + params["b2"])
    return recon, mean, logvar


if __name__ == "__main__":
    key = jax.random.PRNGKey(0)
    k_param, k_x, k_eps = jax.random.split(key, 3)

    B, input_dim, latent_dim = 8, 32, 16

    params = init_params(k_param, input_dim, latent_dim)
    x = jax.random.normal(k_x, (B, input_dim), jnp.float32)
    eps = jax.random.normal(k_eps, (B, latent_dim), jnp.float32)  # randn_like(std)

    fwd = jax.jit(very_simple_vae_forward)
    recon, mean, logvar = fwd(x, params, eps)
    jax.block_until_ready((recon, mean, logvar))

    # sanity check (bf16 matmul inputs + approx reciprocal -> relaxed tolerance)
    recon_r, mean_r, logvar_r = ref_forward(x, params, eps)
    assert jnp.allclose(mean, mean_r, atol=1e-2, rtol=1e-2)
    assert jnp.allclose(logvar, logvar_r, atol=1e-2, rtol=1e-2)
    assert jnp.allclose(recon, recon_r, atol=1e-2, rtol=1e-2)

    print("KERNEL_OK")
</pallas_src>

<mosaic_0001>
module attributes {stable_mosaic.version = 11 : i64} {
  func.func @vae_kernel(%arg0: i32, %arg1: memref<8x128xf32, #tpu.memory_space<vmem>>, %arg2: memref<128x256xbf16, #tpu.memory_space<vmem>>, %arg3: memref<1x256xf32, #tpu.memory_space<vmem>>, %arg4: memref<128x128xbf16, #tpu.memory_space<vmem>>, %arg5: memref<1x128xf32, #tpu.memory_space<vmem>>, %arg6: memref<8x128xf32, #tpu.memory_space<vmem>>, %arg7: memref<8x128xf32, #tpu.memory_space<vmem>>, %arg8: memref<8x128xf32, #tpu.memory_space<vmem>>, %arg9: memref<8x128xf32, #tpu.memory_space<vmem>>) attributes {dimension_semantics = [#tpu.dimension_semantics<parallel>], iteration_bounds = array<i64: 1>, scalar_prefetch = 0 : i64, scratch_operands = 0 : i64, tpu.core_type = #tpu.core_type<tc>, window_params = [{transform_indices = @transform_0, window_bounds = array<i64: 8, 128>}, {pipeline_mode = #tpu.pipeline_mode<synchronous>, transform_indices = @transform_1, window_bounds = array<i64: 128, 256>}, {pipeline_mode = #tpu.pipeline_mode<synchronous>, transform_indices = @transform_2, window_bounds = array<i64: 1, 256>}, {pipeline_mode = #tpu.pipeline_mode<synchronous>, transform_indices = @transform_3, window_bounds = array<i64: 128, 128>}, {pipeline_mode = #tpu.pipeline_mode<synchronous>, transform_indices = @transform_4, window_bounds = array<i64: 1, 128>}, {transform_indices = @transform_5, window_bounds = array<i64: 8, 128>}, {transform_indices = @transform_6, window_bounds = array<i64: 8, 128>}, {transform_indices = @transform_7, window_bounds = array<i64: 8, 128>}, {transform_indices = @transform_8, window_bounds = array<i64: 8, 128>}]} {
    %c0 = arith.constant 0 : index
    %c0_0 = arith.constant 0 : index
    %0 = vector.load %arg1[%c0, %c0_0] : memref<8x128xf32, #tpu.memory_space<vmem>>, vector<8x128xf32>
    %1 = arith.truncf %0 : vector<8x128xf32> to vector<8x128xbf16>
    %c0_1 = arith.constant 0 : index
    %c0_2 = arith.constant 0 : index
    %2 = vector.load %arg2[%c0_1, %c0_2] : memref<128x256xbf16, #tpu.memory_space<vmem>>, vector<128x256xbf16>
    %cst = arith.constant dense<0.000000e+00> : vector<8x256xf32>
    %3 = tpu.matmul %1, %2, %cst {dimension_numbers = #tpu.dot_dimension_numbers<[1], [0], [0], [1], [0, 0, 1, 1], [], []>} : vector<8x128xbf16>, vector<128x256xbf16>, vector<8x256xf32> -> vector<8x256xf32>
    %c0_3 = arith.constant 0 : index
    %c0_4 = arith.constant 0 : index
    %4 = vector.load %arg3[%c0_3, %c0_4] : memref<1x256xf32, #tpu.memory_space<vmem>>, vector<1x256xf32>
    %5 = vector.broadcast %4 : vector<1x256xf32> to vector<8x256xf32>
    %6 = arith.addf %3, %5 : vector<8x256xf32>
    %7 = vector.extract_strided_slice %6 {offsets = [0, 0], sizes = [8, 128], strides = [1, 1]} : vector<8x256xf32> to vector<8x128xf32>
    %8 = vector.extract_strided_slice %6 {offsets = [0, 128], sizes = [8, 128], strides = [1, 1]} : vector<8x256xf32> to vector<8x128xf32>
    %c0_5 = arith.constant 0 : index
    %c0_6 = arith.constant 0 : index
    %9 = vector.load %arg6[%c0_5, %c0_6] : memref<8x128xf32, #tpu.memory_space<vmem>>, vector<8x128xf32>
    %cst_7 = arith.constant 5.000000e-01 : f32
    %10 = vector.broadcast %cst_7 : f32 to vector<8x128xf32>
    %11 = arith.mulf %10, %8 : vector<8x128xf32>
    %12 = math.exp %11 : vector<8x128xf32>
    %13 = arith.mulf %9, %12 : vector<8x128xf32>
    %14 = arith.addf %7, %13 : vector<8x128xf32>
    %15 = arith.truncf %14 : vector<8x128xf32> to vector<8x128xbf16>
    %c0_8 = arith.constant 0 : index
    %c0_9 = arith.constant 0 : index
    %16 = vector.load %arg4[%c0_8, %c0_9] : memref<128x128xbf16, #tpu.memory_space<vmem>>, vector<128x128xbf16>
    %cst_10 = arith.constant dense<0.000000e+00> : vector<8x128xf32>
    %17 = tpu.matmul %15, %16, %cst_10 {dimension_numbers = #tpu.dot_dimension_numbers<[1], [0], [0], [1], [0, 0, 1, 1], [], []>} : vector<8x128xbf16>, vector<128x128xbf16>, vector<8x128xf32> -> vector<8x128xf32>
    %c0_11 = arith.constant 0 : index
    %c0_12 = arith.constant 0 : index
    %18 = vector.load %arg5[%c0_11, %c0_12] : memref<1x128xf32, #tpu.memory_space<vmem>>, vector<1x128xf32>
    %19 = vector.broadcast %18 : vector<1x128xf32> to vector<8x128xf32>
    %20 = arith.addf %17, %19 : vector<8x128xf32>
    %cst_13 = arith.constant 0.000000e+00 : f32
    %21 = vector.broadcast %cst_13 : f32 to vector<8x128xf32>
    %22 = arith.subf %21, %20 : vector<8x128xf32>
    %23 = math.exp %22 : vector<8x128xf32>
    %cst_14 = arith.constant 1.000000e+00 : f32
    %24 = vector.broadcast %cst_14 : f32 to vector<8x128xf32>
    %25 = arith.addf %24, %23 : vector<8x128xf32>
    %26 = tpu.reciprocal %25 {approx = true} : vector<8x128xf32> -> vector<8x128xf32>
    %c0_15 = arith.constant 0 : index
    %c0_16 = arith.constant 0 : index
    %27 = vector.load %arg7[%c0_15, %c0_16] : memref<8x128xf32, #tpu.memory_space<vmem>>, vector<8x128xf32>
    tpu.vector_store %arg7[%c0_15, %c0_16], %26 {strides = array<i32>} : memref<8x128xf32, #tpu.memory_space<vmem>>, vector<8x128xf32>,
    %c0_17 = arith.constant 0 : index
    %c0_18 = arith.constant 0 : index
    %28 = vector.load %arg8[%c0_17, %c0_18] : memref<8x128xf32, #tpu.memory_space<vmem>>, vector<8x128xf32>
    tpu.vector_store %arg8[%c0_17, %c0_18], %7 {strides = array<i32>} : memref<8x128xf32, #tpu.memory_space<vmem>>, vector<8x128xf32>,
    %c0_19 = arith.constant 0 : index
    %c0_20 = arith.constant 0 : index
    %29 = vector.load %arg9[%c0_19, %c0_20] : memref<8x128xf32, #tpu.memory_space<vmem>>, vector<8x128xf32>
    tpu.vector_store %arg9[%c0_19, %c0_20], %8 {strides = array<i32>} : memref<8x128xf32, #tpu.memory_space<vmem>>, vector<8x128xf32>,
    return
  }
  func.func @transform_0(%arg0: i32) -> (i32, i32) {
    %c0_i32 = arith.constant 0 : i32
    %c0_i32_0 = arith.constant 0 : i32
    return %arg0, %c0_i32 : i32, i32
  }
  func.func @transform_1(%arg0: i32) -> (i32, i32) {
    %c0_i32 = arith.constant 0 : i32
    %c0_i32_0 = arith.constant 0 : i32
    %c0_i32_1 = arith.constant 0 : i32
    return %c0_i32, %c0_i32_0 : i32, i32
  }
  func.func @transform_2(%arg0: i32) -> (i32, i32) {
    %c0_i32 = arith.constant 0 : i32
    %c0_i32_0 = arith.constant 0 : i32
    %c0_i32_1 = arith.constant 0 : i32
    return %c0_i32, %c0_i32_0 : i32, i32
  }
  func.func @transform_3(%arg0: i32) -> (i32, i32) {
    %c0_i32 = arith.constant 0 : i32
    %c0_i32_0 = arith.constant 0 : i32
    %c0_i32_1 = arith.constant 0 : i32
    return %c0_i32, %c0_i32_0 : i32, i32
  }
  func.func @transform_4(%arg0: i32) -> (i32, i32) {
    %c0_i32 = arith.constant 0 : i32
    %c0_i32_0 = arith.constant 0 : i32
    %c0_i32_1 = arith.constant 0 : i32
    return %c0_i32, %c0_i32_0 : i32, i32
  }
  func.func @transform_5(%arg0: i32) -> (i32, i32) {
    %c0_i32 = arith.constant 0 : i32
    %c0_i32_0 = arith.constant 0 : i32
    return %arg0, %c0_i32 : i32, i32
  }
  func.func @transform_6(%arg0: i32) -> (i32, i32) {
    %c0_i32 = arith.constant 0 : i32
    %c0_i32_0 = arith.constant 0 : i32
    return %arg0, %c0_i32 : i32, i32
  }
  func.func @transform_7(%arg0: i32) -> (i32, i32) {
    %c0_i32 = arith.constant 0 : i32
    %c0_i32_0 = arith.constant 0 : i32
    return %arg0, %c0_i32 : i32, i32
  }
  func.func @transform_8(%arg0: i32) -> (i32, i32) {
    %c0_i32 = arith.constant 0 : i32
    %c0_i32_0 = arith.constant 0 : i32
    return %arg0, %c0_i32 : i32, i32
  }
}

</mosaic_0001>

<llo_original>
// kernel: very_simple_vae_forward.1
$region0: #{very_simple_vae_forward.1}
  #allocation0 [shape = 'u32[]', space=smem, size = 0x4, offset = 0x4, fixed_abs, tag = 'smem constant byte address 0x4 - core index']
  #allocation1 [shape = 'u32[144,128]{1,0:T(1,128)}', space=vmem, size = 0x12000, scoped, tag = 'internal scratch']
  %s0 = inlined_call_operand.vmem [shape: f32[8,128], index: 0, kind: input, shape index: {}]
  %s1 = inlined_call_operand.vmem [shape: bf16[128,256], index: 1, kind: input, shape index: {}]
  %s2 = inlined_call_operand.vmem [shape: f32[1,256], index: 2, kind: input, shape index: {}]
  %s3 = inlined_call_operand.vmem [shape: bf16[128,128], index: 3, kind: input, shape index: {}]
  %s4 = inlined_call_operand.vmem [shape: f32[1,128], index: 4, kind: input, shape index: {}]
  %s5 = inlined_call_operand.vmem [shape: f32[8,128], index: 5, kind: input, shape index: {}]
  %s6 = inlined_call_operand.hbm [shape: f32[8,128], index: 6, kind: output, shape index: {0}]
  %s7 = inlined_call_operand.hbm [shape: f32[8,128], index: 7, kind: output, shape index: {1}]
  %s8 = inlined_call_operand.hbm [shape: f32[8,128], index: 8, kind: output, shape index: {2}]
  %9 = xla_tuple %s6, %s7, %s8
  %s10 = sld [smem:[#allocation0]]
  $region50: #{very_simple_vae_forward.1} parent=0
    _
  %s12 = ssub.s32 1, %s10
  %s13 = scalar_select 0, %s12, %s10
  $region1: #{very_simple_vae_forward.1} parent=0
    #allocation2 [shape = 'u8[4096]{0}', space=vmem, size = 0x1000, scoped, tag = 'output window, operand 0, single buffered']
    #allocation3 [shape = 's32[1]{0}', space=sflag, size = 0x4, scoped, tag = 'scoped memory for very_simple_vae_forward.1']
    #allocation4 [shape = 'u8[4096]{0}', space=vmem, size = 0x1000, scoped, tag = 'output window, operand 1, single buffered']
    #allocation5 [shape = 's32[1]{0}', space=sflag, size = 0x4, scoped, tag = 'scoped memory for very_simple_vae_forward.1']
    #allocation6 [shape = 'u8[4096]{0}', space=vmem, size = 0x1000, scoped, tag = 'output window, operand 2, single buffered']
    %14 = vsyncpa [#allocation3], 0
    %15 = vsyncpa [#allocation5], 0
    // Predicated region
    $region2: #{very_simple_vae_forward.1} parent=1 // pred_check
      _
    $region3: #{very_simple_vae_forward.1} parent=1 // pred_check_branch
      %17 = sbr.rel (0) target = $region5
    $region4: #{very_simple_vae_forward.1} parent=1 // pred_region
      _
    $region5: #{very_simple_vae_forward.1} parent=1 // pred_fallthru
      _
    // Predicated region
    $region6: #{very_simple_vae_forward.1} parent=1 // pred_check
      _
    $region7: #{very_simple_vae_forward.1} parent=1 // pred_check_branch
      %19 = sbr.rel (0) target = $region9
    $region8: #{very_simple_vae_forward.1} parent=1 // pred_region
      _
    $region9: #{very_simple_vae_forward.1} parent=1 // pred_fallthru
      _
    // Predicated region
    $region10: #{very_simple_vae_forward.1} parent=1 // pred_check
      _
    $region11: #{very_simple_vae_forward.1} parent=1 // pred_check_branch
      %21 = sbr.rel (0) target = $region13
    $region12: #{very_simple_vae_forward.1} parent=1 // pred_region
      _
    $region13: #{very_simple_vae_forward.1} parent=1 // pred_fallthru
      _
    // Predicated region
    $region14: #{very_simple_vae_forward.1} parent=1 // pred_check
      _
    $region15: #{very_simple_vae_forward.1} parent=1 // pred_check_branch
      %23 = sbr.rel (0) target = $region17
    $region16: #{very_simple_vae_forward.1} parent=1 // pred_region
      _
    $region17: #{very_simple_vae_forward.1} parent=1 // pred_fallthru
      _
    // Predicated region
    $region18: #{very_simple_vae_forward.1} parent=1 // pred_check
      _
    $region19: #{very_simple_vae_forward.1} parent=1 // pred_check_branch
      %25 = sbr.rel (0) target = $region21
    $region20: #{very_simple_vae_forward.1} parent=1 // pred_region
      _
    $region21: #{very_simple_vae_forward.1} parent=1 // pred_fallthru
      _
    // Predicated region
    $region22: #{very_simple_vae_forward.1} parent=1 // pred_check
      _
    $region23: #{very_simple_vae_forward.1} parent=1 // pred_check_branch
      %27 = sbr.rel (0) target = $region25
    $region24: #{very_simple_vae_forward.1} parent=1 // pred_region
      _
    $region25: #{very_simple_vae_forward.1} parent=1 // pred_fallthru
      _
    %v29 = vld [vmem:[%s0] sm:$0xff]
    %v30 = vpack.c.bf16 %v29, %v29
    %v31 = vld [vmem:[%s1] sm:$0xff]
    %v32 = vld [vmem:[%s1 + $0x8] sm:$0xff]
    %v33 = vld [vmem:[%s1 + $0x10] sm:$0xff]
    %v34 = vld [vmem:[%s1 + $0x18] sm:$0xff]
    %v35 = vld [vmem:[%s1 + $0x20] sm:$0xff]
    %v36 = vld [vmem:[%s1 + $0x28] sm:$0xff]
    %v37 = vld [vmem:[%s1 + $0x30] sm:$0xff]
    %v38 = vld [vmem:[%s1 + $0x38] sm:$0xff]
    %v39 = vld [vmem:[%s1 + $0x40] sm:$0xff]
    %v40 = vld [vmem:[%s1 + $0x48] sm:$0xff]
    %v41 = vld [vmem:[%s1 + $0x50] sm:$0xff]
    %v42 = vld [vmem:[%s1 + $0x58] sm:$0xff]
    %v43 = vld [vmem:[%s1 + $0x60] sm:$0xff]
    %v44 = vld [vmem:[%s1 + $0x68] sm:$0xff]
    %v45 = vld [vmem:[%s1 + $0x70] sm:$0xff]
    %v46 = vld [vmem:[%s1 + $0x78] sm:$0xff]
    %v47 = vld [vmem:[%s2] sm:$0x3]
    %v49 = vlaneseq
    %v50 = vshrl.u32 %v49, 7
    %v51 = vsub.s32 0, %v50
    %v52 = vrot.slane %v47, %v51
    %v53 = vlaneseq
    %v54 = vshrl.u32 %v53, 7
    %v55 = vsub.s32 1, %v54
    %v56 = vrot.slane %v47, %v55
    %v75 = vunpack.c.l.b16 %v31
    %v76 = vunpack.c.h.b16 %v31
    %v77 = vunpack.c.l.b16 %v32
    %v78 = vunpack.c.h.b16 %v32
    %v79 = vunpack.c.l.b16 %v33
    %v80 = vunpack.c.h.b16 %v33
    %v81 = vunpack.c.l.b16 %v34
    %v82 = vunpack.c.h.b16 %v34
    %v83 = vunpack.c.l.b16 %v35
    %v84 = vunpack.c.h.b16 %v35
    %v85 = vunpack.c.l.b16 %v36
    %v86 = vunpack.c.h.b16 %v36
    %v87 = vunpack.c.l.b16 %v37
    %v88 = vunpack.c.h.b16 %v37
    %v89 = vunpack.c.l.b16 %v38
    %v90 = vunpack.c.h.b16 %v38
    %v91 = vunpack.c.l.b16 %v39
    %v92 = vunpack.c.h.b16 %v39
    %v93 = vunpack.c.l.b16 %v40
    %v94 = vunpack.c.h.b16 %v40
    %v95 = vunpack.c.l.b16 %v41
    %v96 = vunpack.c.h.b16 %v41
    %v97 = vunpack.c.l.b16 %v42
    %v98 = vunpack.c.h.b16 %v42
    %v99 = vunpack.c.l.b16 %v43
    %v100 = vunpack.c.h.b16 %v43
    %v101 = vunpack.c.l.b16 %v44
    %v102 = vunpack.c.h.b16 %v44
    %v103 = vunpack.c.l.b16 %v45
    %v104 = vunpack.c.h.b16 %v45
    %v105 = vunpack.c.l.b16 %v46
    %v106 = vunpack.c.h.b16 %v46
    %v107 = vpack.c.b16 %v77, %v75
    %v108 = vpack.c.b16 %v78, %v76
    %v109 = vpack.c.b16 %v81, %v79
    %v110 = vpack.c.b16 %v82, %v80
    %v111 = vpack.c.b16 %v85, %v83
    %v112 = vpack.c.b16 %v86, %v84
    %v113 = vpack.c.b16 %v89, %v87
    %v114 = vpack.c.b16 %v90, %v88
    %v115 = vpack.c.b16 %v93, %v91
    %v116 = vpack.c.b16 %v94, %v92
    %v117 = vpack.c.b16 %v97, %v95
    %v118 = vpack.c.b16 %v98, %v96
    %v119 = vpack.c.b16 %v101, %v99
    %v120 = vpack.c.b16 %v102, %v100
    %v121 = vpack.c.b16 %v105, %v103
    %v122 = vpack.c.b16 %v106, %v104
    %139 = vmatprep.subr.bf16.mxu0 %v122
    %140 = vmatpush1.bf16.msra.mxu0 %v121
    %141 = vmatprep.subr.bf16.mxu0 %v120
    %142 = vmatpush1.bf16.msra.mxu0 %v119
    %143 = vmatprep.subr.bf16.mxu0 %v118
    %144 = vmatpush1.bf16.msra.mxu0 %v117
    %145 = vmatprep.subr.bf16.mxu0 %v116
    %146 = vmatpush1.bf16.msra.mxu0 %v115
    %147 = vmatprep.subr.bf16.mxu0 %v114
    %148 = vmatpush1.bf16.msra.mxu0 %v113
    %149 = vmatprep.subr.bf16.mxu0 %v112
    %150 = vmatpush1.bf16.msra.mxu0 %v111
    %151 = vmatprep.subr.bf16.mxu0 %v110
    %152 = vmatpush1.bf16.msra.mxu0 %v109
    %153 = vmatprep.subr.bf16.mxu0 %v108
    %154 = vmatpush1.bf16.msra.mxu0 %v107
    %155 = vmatprep.subr.bf16.mxu0 0
    %156 = vmatpush2.bf16.msra.mxu0 0
    %157 = vmatprep.subr.bf16.mxu0 0
    %158 = vmatpush2.bf16.msra.mxu0 0
    %159 = vmatprep.subr.bf16.mxu0 0
    %160 = vmatpush2.bf16.msra.mxu0 0
    %161 = vmatprep.subr.bf16.mxu0 0
    %162 = vmatpush2.bf16.msra.mxu0 0
    %163 = vmatprep.subr.bf16.mxu0 0
    %164 = vmatpush2.bf16.msra.mxu0 0
    %165 = vmatprep.subr.bf16.mxu0 0
    %166 = vmatpush2.bf16.msra.mxu0 0
    %167 = vmatprep.subr.bf16.mxu0 0
    %168 = vmatpush2.bf16.msra.mxu0 0
    %169 = vmatprep.subr.bf16.mxu0 0
    %170 = vmatpush2.bf16.msra.mxu0 0
    %171 = vmatprep.mubr.bf16.mxu0 0
    %172 = vmatmul.mubr.bf16.gmra.mxu0 %v30
    %v173 = vpop.f32.mrf.mxu0
    %v174 = vadd.f32 %v52, %v173
    %v175 = vpop.f32.mrf.mxu0
    %v176 = vadd.f32 %v56, %v175
    %v177 = vpop.f32.mrf.mxu0
    %v178 = vpop.f32.mrf.mxu0
    %179 = vdwg.mxu0
    %v180 = vld [vmem:[%s5] sm:$0xff]
    %v181 = vmul.f32 %v176, 0.5
    %v182 = vmul.f32 %v181, 1.442695
    %v183 = vpow.pop %v182
    %v184 = vmul.f32 %v180, %v183
    %v185 = vadd.f32 %v174, %v184
    %v186 = vpack.c.bf16 %v185, %v185
    %v187 = vld [vmem:[%s3] sm:$0xf]
    %v188 = vld [vmem:[%s3 + $0x4] sm:$0xf]
    %v189 = vld [vmem:[%s3 + $0x8] sm:$0xf]
    %v190 = vld [vmem:[%s3 + $0xc] sm:$0xf]
    %v191 = vld [vmem:[%s3 + $0x10] sm:$0xf]
    %v192 = vld [vmem:[%s3 + $0x14] sm:$0xf]
    %v193 = vld [vmem:[%s3 + $0x18] sm:$0xf]
    %v194 = vld [vmem:[%s3 + $0x1c] sm:$0xf]
    %v195 = vld [vmem:[%s3 + $0x20] sm:$0xf]
    %v196 = vld [vmem:[%s3 + $0x24] sm:$0xf]
    %v197 = vld [vmem:[%s3 + $0x28] sm:$0xf]
    %v198 = vld [vmem:[%s3 + $0x2c] sm:$0xf]
    %v199 = vld [vmem:[%s3 + $0x30] sm:$0xf]
    %v200 = vld [vmem:[%s3 + $0x34] sm:$0xf]
    %v201 = vld [vmem:[%s3 + $0x38] sm:$0xf]
    %v202 = vld [vmem:[%s3 + $0x3c] sm:$0xf]
    %v203 = vld [vmem:[%s4] sm:$0x1]
    %v205 = vlaneseq
    %v206 = vshrl.u32 %v205, 7
    %v207 = vsub.s32 0, %v206
    %v208 = vrot.slane %v203, %v207
    %v226 = vunpack.c.l.b16 %v187
    %v227 = vunpack.c.l.b16 %v188
    %v228 = vunpack.c.l.b16 %v189
    %v229 = vunpack.c.l.b16 %v190
    %v230 = vunpack.c.l.b16 %v191
    %v231 = vunpack.c.l.b16 %v192
    %v232 = vunpack.c.l.b16 %v193
    %v233 = vunpack.c.l.b16 %v194
    %v234 = vunpack.c.l.b16 %v195
    %v235 = vunpack.c.l.b16 %v196
    %v236 = vunpack.c.l.b16 %v197
    %v237 = vunpack.c.l.b16 %v198
    %v238 = vunpack.c.l.b16 %v199
    %v239 = vunpack.c.l.b16 %v200
    %v240 = vunpack.c.l.b16 %v201
    %v241 = vunpack.c.l.b16 %v202
    %v242 = vpack.c.b16 %v227, %v226
    %v243 = vpack.c.b16 %v229, %v228
    %v244 = vpack.c.b16 %v231, %v230
    %v245 = vpack.c.b16 %v233, %v232
    %v246 = vpack.c.b16 %v235, %v234
    %v247 = vpack.c.b16 %v237, %v236
    %v248 = vpack.c.b16 %v239, %v238
    %v249 = vpack.c.b16 %v241, %v240
    %258 = vmatprep.subr.bf16.mxu0 0
    %259 = vmatpush1.bf16.msra.mxu0 %v249
    %260 = vmatprep.subr.bf16.mxu0 0
    %261 = vmatpush1.bf16.msra.mxu0 %v248
    %262 = vmatprep.subr.bf16.mxu0 0
    %263 = vmatpush1.bf16.msra.mxu0 %v247
    %264 = vmatprep.subr.bf16.mxu0 0
    %265 = vmatpush1.bf16.msra.mxu0 %v246
    %266 = vmatprep.subr.bf16.mxu0 0
    %267 = vmatpush1.bf16.msra.mxu0 %v245
    %268 = vmatprep.subr.bf16.mxu0 0
    %269 = vmatpush1.bf16.msra.mxu0 %v244
    %270 = vmatprep.subr.bf16.mxu0 0
    %271 = vmatpush1.bf16.msra.mxu0 %v243
    %272 = vmatprep.subr.bf16.mxu0 0
    %273 = vmatpush1.bf16.msra.mxu0 %v242
    %274 = vmatprep.subr.bf16.mxu0 0
    %275 = vmatpush2.bf16.msra.mxu0 0
    %276 = vmatprep.subr.bf16.mxu0 0
    %277 = vmatpush2.bf16.msra.mxu0 0
    %278 = vmatprep.subr.bf16.mxu0 0
    %279 = vmatpush2.bf16.msra.mxu0 0
    %280 = vmatprep.subr.bf16.mxu0 0
    %281 = vmatpush2.bf16.msra.mxu0 0
    %282 = vmatprep.subr.bf16.mxu0 0
    %283 = vmatpush2.bf16.msra.mxu0 0
    %284 = vmatprep.subr.bf16.mxu0 0
    %285 = vmatpush2.bf16.msra.mxu0 0
    %286 = vmatprep.subr.bf16.mxu0 0
    %287 = vmatpush2.bf16.msra.mxu0 0
    %288 = vmatprep.subr.bf16.mxu0 0
    %289 = vmatpush2.bf16.msra.mxu0 0
    %290 = vmatprep.mubr.bf16.mxu0 0
    %291 = vmatmul.mubr.bf16.gmra.mxu0 %v186
    %v292 = vpop.f32.mrf.mxu0
    %v293 = vadd.f32 %v208, %v292
    %v294 = vpop.f32.mrf.mxu0
    %v295 = vpop.f32.mrf.mxu0
    %v296 = vpop.f32.mrf.mxu0
    %297 = vdwg.mxu0
    %v298 = vsub.f32 0.0, %v293
    %v299 = vmul.f32 %v298, 1.442695
    %v300 = vpow.pop %v299
    %v301 = vadd.f32 %v300, 1.0
    %v302 = vrcp.pop %v301
    %303 = vst [vmem:[#allocation2] sm:$0xff] %v302
    %304 = vst [vmem:[#allocation4] sm:$0xff] %v174
    %305 = vst [vmem:[#allocation6] sm:$0xff] %v176
    // Predicated region
    $region26: #{very_simple_vae_forward.1} parent=1 // pred_check
      _
    $region27: #{very_simple_vae_forward.1} parent=1 // pred_check_branch
      %307 = sbr.rel (0) target = $region29
    $region28: #{very_simple_vae_forward.1} parent=1 // pred_region
      %s309 = ssub.s32 128, 128
      %310 = vsyncadd [#allocation3], %s309
      %s312 = sshll.u32 [#allocation2], 4
      %s313 = int_to_ptr.vmem [resolvable:$true] %s312
      %315 = dma.vmem_to_hbm [thread:$0]  %s313, 128, %s6, [#allocation3]
    $region29: #{very_simple_vae_forward.1} parent=1 // pred_fallthru
      _
    // Predicated region
    $region30: #{very_simple_vae_forward.1} parent=1 // pred_check
      _
    $region31: #{very_simple_vae_forward.1} parent=1 // pred_check_branch
      %317 = sbr.rel (0) target = $region33
    $region32: #{very_simple_vae_forward.1} parent=1 // pred_region
      %s319 = ssub.s32 128, 128
      %320 = vsyncadd [#allocation5], %s319
      %s322 = sshll.u32 [#allocation4], 4
      %s323 = int_to_ptr.vmem [resolvable:$true] %s322
      %325 = dma.vmem_to_hbm [thread:$0]  %s323, 128, %s7, [#allocation5]
    $region33: #{very_simple_vae_forward.1} parent=1 // pred_fallthru
      _
    // Predicated region
    $region34: #{very_simple_vae_forward.1} parent=1 // pred_check
      _
    $region35: #{very_simple_vae_forward.1} parent=1 // pred_check_branch
      %327 = sbr.rel (0) target = $region37
    $region36: #{very_simple_vae_forward.1} parent=1 // pred_region
      %s329 = ssub.s32 128, 128
      %330 = vsyncadd [#allocation5], %s329
      %s332 = sshll.u32 [#allocation6], 4
      %s333 = int_to_ptr.vmem [resolvable:$true] %s332
      %335 = dma.vmem_to_hbm [thread:$0]  %s333, 128, %s8, [#allocation5]
    $region37: #{very_simple_vae_forward.1} parent=1 // pred_fallthru
      _
    // Predicated region
    $region38: #{very_simple_vae_forward.1} parent=1 // pred_check
      _
    $region39: #{very_simple_vae_forward.1} parent=1 // pred_check_branch
      %337 = sbr.rel (0) target = $region41
    $region40: #{very_simple_vae_forward.1} parent=1 // pred_region
      %338 = dma.done [#allocation3], 128
    $region41: #{very_simple_vae_forward.1} parent=1 // pred_fallthru
      _
    // Predicated region
    $region42: #{very_simple_vae_forward.1} parent=1 // pred_check
      _
    $region43: #{very_simple_vae_forward.1} parent=1 // pred_check_branch
      %340 = sbr.rel (0) target = $region45
    $region44: #{very_simple_vae_forward.1} parent=1 // pred_region
      %341 = dma.done [#allocation5], 128
    $region45: #{very_simple_vae_forward.1} parent=1 // pred_fallthru
      _
    // Predicated region
    $region46: #{very_simple_vae_forward.1} parent=1 // pred_check
      _
    $region47: #{very_simple_vae_forward.1} parent=1 // pred_check_branch
      %343 = sbr.rel (0) target = $region49
    $region48: #{very_simple_vae_forward.1} parent=1 // pred_region
      %344 = dma.done [#allocation5], 128
    $region49: #{very_simple_vae_forward.1} parent=1 // pred_fallthru
      _
    %345 = vsyncpa [#allocation3], 1
    %346 = vsyncpa [#allocation5], 1

</llo_original>
